<compile_context>
chip_gen: v7x
topology: tpu7x:2x2x1
jax: 0.10.0
libtpu: 0.0.40
codegen_flags: <defaults>
</compile_context>

<pallas_src>
import jax
import jax.numpy as jnp
from jax.experimental import pallas as pl
from jax.experimental.pallas import tpu as pltpu

_LANES = 512                          # lane-dense last dim (multiple of 128)
_TARGET_BLOCK_ELEMS = 1024 * _LANES   # 1024 x 512 f32 = 2 MiB per block
                                      # -> in+out double-buffered ~8 MiB VMEM


def _star_relu_kernel(scale_ref, bias_ref, x_ref, o_ref):
    # scale_ref / bias_ref: (1,) f32 scalars in SMEM.
    # x_ref / o_ref: (block_rows, _LANES) tiles in VMEM.
    s = scale_ref[0]
    b = bias_ref[0]
    x = x_ref[...].astype(jnp.float32)
    r = jnp.maximum(x, 0.0)
    o_ref[...] = (s * (r * r) + b).astype(o_ref.dtype)


@jax.jit
def star_relu(x, scale, bias):
    """StarReLU forward: scale * relu(x)**2 + bias.  Works for any input shape."""
    orig_shape = x.shape
    total = x.size
    scale = scale.reshape(1).astype(jnp.float32)
    bias = bias.reshape(1).astype(jnp.float32)

    # Flatten to a lane-dense 2-D slab (rows, _LANES).
    rows = pl.cdiv(total, _LANES)
    padded = rows * _LANES
    xf = x.reshape(-1)
    if padded != total:
        xf = jnp.pad(xf, (0, padded - total))
    x2d = xf.reshape(rows, _LANES)

    max_block_rows = max(8, (_TARGET_BLOCK_ELEMS // _LANES) // 8 * 8)
    if rows <= max_block_rows:
        block_rows = rows          # single block == full array dims
        grid = 1
    else:
        block_rows = max_block_rows  # multiple of 8 -> satisfies (8,128) rule
        grid = pl.cdiv(rows, block_rows)  # ragged last block clipped by Pallas

    out2d = pl.pallas_call(
        _star_relu_kernel,
        out_shape=jax.ShapeDtypeStruct((rows, _LANES), x.dtype),
        grid=(grid,),
        in_specs=[
            pl.BlockSpec(memory_space=pltpu.MemorySpace.SMEM),     # scale (1,)
            pl.BlockSpec(memory_space=pltpu.MemorySpace.SMEM),     # bias  (1,)
            pl.BlockSpec((block_rows, _LANES), lambda i: (i, 0)),  # x tile
        ],
        out_specs=pl.BlockSpec((block_rows, _LANES), lambda i: (i, 0)),
        compiler_params=pltpu.CompilerParams(
            dimension_semantics=("parallel",),
            vmem_limit_bytes=32 * 1024 * 1024,
        ),
    )(scale, bias, x2d)

    out = out2d.reshape(-1)
    if padded != total:
        out = out[:total]
    return out.reshape(orig_shape)


def _reference(x, scale, bias):
    """Pure-JAX reference of StarReLU.forward."""
    return scale[0] * jnp.maximum(x, 0.0) ** 2 + bias[0]


if __name__ == "__main__":
    key = jax.random.PRNGKey(0)
    N, C, H, W = 2, 4, 16, 16
    x = jax.random.normal(key, (N, C, H, W), jnp.float32)

    # Learnable scalar parameters (module default is scale=1.0, bias=0.0; use
    # non-trivial "learned" values so both parameters are actually exercised).
    scale = jnp.array([1.5], jnp.float32)
    bias = jnp.array([0.25], jnp.float32)

    out = star_relu(x, scale, bias)
    out = jax.block_until_ready(out)

    ref = _reference(x, scale, bias)
    assert out.shape == x.shape
    assert jnp.allclose(out, ref, atol=1e-6, rtol=1e-6), "mismatch vs reference"

    print("KERNEL_OK")
</pallas_src>

<mosaic_0001>
module attributes {stable_mosaic.version = 11 : i64} {
  func.func @_star_relu_kernel(%arg0: i32, %arg1: memref<1xf32, #tpu.memory_space<smem>>, %arg2: memref<1xf32, #tpu.memory_space<smem>>, %arg3: memref<4x512xf32, #tpu.memory_space<vmem>>, %arg4: memref<4x512xf32, #tpu.memory_space<vmem>>) attributes {dimension_semantics = [#tpu.dimension_semantics<parallel>], iteration_bounds = array<i64: 1>, scalar_prefetch = 0 : i64, scratch_operands = 0 : i64, tpu.core_type = #tpu.core_type<tc>, window_params = [{transform_indices = @transform_0, window_bounds = array<i64: 1>}, {transform_indices = @transform_1, window_bounds = array<i64: 1>}, {transform_indices = @transform_2, window_bounds = array<i64: 4, 512>}, {transform_indices = @transform_3, window_bounds = array<i64: 4, 512>}]} {
    %c0 = arith.constant 0 : index
    %0 = memref.load %arg1[%c0] : memref<1xf32, #tpu.memory_space<smem>>
    %c0_0 = arith.constant 0 : index
    %1 = memref.load %arg2[%c0_0] : memref<1xf32, #tpu.memory_space<smem>>
    %c0_1 = arith.constant 0 : index
    %c0_2 = arith.constant 0 : index
    %2 = vector.load %arg3[%c0_1, %c0_2] : memref<4x512xf32, #tpu.memory_space<vmem>>, vector<4x512xf32>
    %cst = arith.constant 0.000000e+00 : f32
    %3 = vector.broadcast %cst : f32 to vector<4x512xf32>
    %4 = arith.maximumf %2, %3 : vector<4x512xf32>
    %5 = arith.mulf %4, %4 : vector<4x512xf32>
    %6 = vector.broadcast %0 : f32 to vector<4x512xf32>
    %7 = arith.mulf %6, %5 : vector<4x512xf32>
    %8 = vector.broadcast %1 : f32 to vector<4x512xf32>
    %9 = arith.addf %7, %8 : vector<4x512xf32>
    %c0_3 = arith.constant 0 : index
    %c0_4 = arith.constant 0 : index
    %10 = vector.load %arg4[%c0_3, %c0_4] : memref<4x512xf32, #tpu.memory_space<vmem>>, vector<4x512xf32>
    tpu.vector_store %arg4[%c0_3, %c0_4], %9 {strides = array<i32>} : memref<4x512xf32, #tpu.memory_space<vmem>>, vector<4x512xf32>,
    return
  }
  func.func @transform_0(%arg0: i32) -> i32 {
    %c0_i32 = arith.constant 0 : i32
    %c0_i32_0 = arith.constant 0 : i32
    return %c0_i32 : i32
  }
  func.func @transform_1(%arg0: i32) -> i32 {
    %c0_i32 = arith.constant 0 : i32
    %c0_i32_0 = arith.constant 0 : i32
    return %c0_i32 : i32
  }
  func.func @transform_2(%arg0: i32) -> (i32, i32) {
    %c0_i32 = arith.constant 0 : i32
    %c0_i32_0 = arith.constant 0 : i32
    return %arg0, %c0_i32 : i32, i32
  }
  func.func @transform_3(%arg0: i32) -> (i32, i32) {
    %c0_i32 = arith.constant 0 : i32
    %c0_i32_0 = arith.constant 0 : i32
    return %arg0, %c0_i32 : i32, i32
  }
}

</mosaic_0001>

<llo_original>
// kernel: star_relu.1
$region0: #{star_relu.1}
  #allocation0 [shape = 'u32[]', space=smem, size = 0x4, offset = 0x4, fixed_abs, tag = 'smem constant byte address 0x4 - core index']
  #allocation1 [shape = 'u32[144,128]{1,0:T(1,128)}', space=vmem, size = 0x12000, scoped, tag = 'internal scratch']
  #allocation2 [shape = 'f32[1]{0:T(128)S(6)}', space=smem, size = 0x200, scoped, tag = 'scoped memory for star_relu.1']
  #allocation3 [shape = 'f32[1]{0:T(128)S(6)}', space=smem, size = 0x200, scoped, tag = 'scoped memory for star_relu.1']
  %s0 = inlined_call_operand.<no memory space> [shape: f32[1], index: 0, kind: input, shape index: {}]
  %s1 = inlined_call_operand.<no memory space> [shape: f32[1], index: 1, kind: input, shape index: {}]
  %s2 = inlined_call_operand.vmem [shape: f32[4,512], index: 2, kind: input, shape index: {}]
  %s3 = inlined_call_operand.vmem [shape: f32[4,512], index: 3, kind: output, shape index: {}]
  %s4 = sld [smem:[#allocation0]]
  $region22: #{star_relu.1} parent=0
    _
  %s6 = ssub.s32 1, %s4
  %s7 = scalar_select 0, %s6, %s4
  %8 = sst [smem:[#allocation2]] %s0
  %9 = sst [smem:[#allocation3]] %s1
  // Predicated region
  $region2: #{star_relu.1} parent=0 // pred_check
    _
  $region3: #{star_relu.1} parent=0 // pred_check_branch
    %11 = sbr.rel (0) target = $region5
  $region4: #{star_relu.1} parent=0 // pred_region
    _
  $region5: #{star_relu.1} parent=0 // pred_fallthru
    _
  // Predicated region
  $region6: #{star_relu.1} parent=0 // pred_check
    _
  $region7: #{star_relu.1} parent=0 // pred_check_branch
    %13 = sbr.rel (0) target = $region9
  $region8: #{star_relu.1} parent=0 // pred_region
    _
  $region9: #{star_relu.1} parent=0 // pred_fallthru
    _
  // Predicated region
  $region10: #{star_relu.1} parent=0 // pred_check
    _
  $region11: #{star_relu.1} parent=0 // pred_check_branch
    %15 = sbr.rel (0) target = $region13
  $region12: #{star_relu.1} parent=0 // pred_region
    _
  $region13: #{star_relu.1} parent=0 // pred_fallthru
    _
  %s16 = sld [smem:[#allocation2]]
  %s17 = sld [smem:[#allocation3]]
  %v18 = vld [vmem:[%s2] sm:$0xff]
  %v19 = vld [vmem:[%s2 + $0x8] sm:$0xff]
  %v20 = vmax.f32 %v18, 0.0
  %v21 = vmax.f32 %v19, 0.0
  %v22 = vmul.f32 %v20, %v20
  %v23 = vmul.f32 %v21, %v21
  %v24 = vstv %s16
  %v25 = vmul.f32 %v24, %v22
  %v26 = vmul.f32 %v24, %v23
  %v27 = vstv %s17
  %v28 = vadd.f32 %v25, %v27
  %v29 = vadd.f32 %v26, %v27
  %30 = vst [vmem:[%s3] sm:$0xff] %v28
  %31 = vst [vmem:[%s3 + $0x8] sm:$0xff] %v29
  // Predicated region
  $region14: #{star_relu.1} parent=0 // pred_check
    _
  $region15: #{star_relu.1} parent=0 // pred_check_branch
    %33 = sbr.rel (0) target = $region17
  $region16: #{star_relu.1} parent=0 // pred_region
    _
  $region17: #{star_relu.1} parent=0 // pred_fallthru
    _
  // Predicated region
  $region18: #{star_relu.1} parent=0 // pred_check
    _
  $region19: #{star_relu.1} parent=0 // pred_check_branch
    %35 = sbr.rel (0) target = $region21
  $region20: #{star_relu.1} parent=0 // pred_region
    _
  $region21: #{star_relu.1} parent=0 // pred_fallthru
    _

</llo_original>
